<compile_context>
chip_gen: v6e
topology: v6e:2x2x1
jax: 0.10.0
libtpu: 0.0.40
codegen_flags: <defaults>
</compile_context>

<pallas_src>
import jax
import jax.numpy as jnp
from jax.experimental import pallas as pl
from jax.experimental.pallas import tpu as pltpu


def _final_blaze_kernel(cols_ref, w_ref, b_ref, o_ref):
    # cols_ref: (9*C, TS)  stride-2 im2col taps (tap-major, channel-minor rows);
    #                      lanes = flattened output pixels (lane-dense).
    # w_ref:    (C, 9*C)   folded depthwise*pointwise weights (constant block).
    # b_ref:    (C, 1)     folded bias (constant block), broadcast over lanes.
    # o_ref:    (C, TS)    output tile, channels on sublanes, pixels on lanes.
    y = jnp.dot(w_ref[...], cols_ref[...],
                preferred_element_type=jnp.float32,
                precision=jax.lax.Precision.HIGHEST)
    o_ref[...] = jnp.maximum(y + b_ref[...], 0.0).astype(o_ref.dtype)   # bias + ReLU


def _round_up(x, m):
    return ((x + m - 1) // m) * m


@jax.jit
def final_blaze_block(x_nchw, dw_w, dw_b, pw_w, pw_b):
    """x_nchw: (N,C,H,W) f32.  dw_w: (C,1,3,3), dw_b: (C,), pw_w: (C,C,1,1), pw_b: (C,)."""
    N, C, H, W = x_nchw.shape
    Ho = (H + 2 - 3) // 2 + 1
    Wo = (W + 2 - 3) // 2 + 1
    total = N * Ho * Wo

    # ---- fold depthwise + pointwise weights and both biases (tiny, XLA) ----
    dww = dw_w[:, 0, :, :].reshape(C, 9)                             # (C_in, 9), k = ki*3+kj
    pww = pw_w[:, :, 0, 0]                                           # (C_out, C_in)
    wfold = (pww[:, None, :] * dww.T[None, :, :]).reshape(C, 9 * C)  # (C_out, 9*C_in)
    bfold = (pww @ dw_b + pw_b).reshape(C, 1)                        # (C_out, 1)

    # ---- stride-2 im2col of the right/bottom-padded input (fused under jit) ----
    #   cols[k*C + c, n*S + i*Wo + j] = x_pad[n, c, 2*i + ki, 2*j + kj],  k = ki*3 + kj
    xp = jnp.pad(x_nchw, ((0, 0), (0, 0), (0, 2), (0, 2)))           # F.pad(x, (0,2,0,2))
    taps = [xp[:, :, ki:ki + 2 * Ho:2, kj:kj + 2 * Wo:2]
            for ki in range(3) for kj in range(3)]                   # 9 x (N, C, Ho, Wo)
    cols = jnp.stack(taps, axis=0)                                   # (9, N, C, Ho, Wo)
    cols = jnp.transpose(cols, (0, 2, 1, 3, 4)).reshape(9 * C, total)

    # ---- lane-tile policy: VMEM-budgeted, lane-dense, >=2 steps when big ----
    VMEM_BUDGET = 16 * 1024 * 1024          # working-set budget, safe on every generation
    itemsize = 4                            # f32
    bytes_per_col = (2 * 9 * C + 2 * C) * itemsize        # double-buffered cols + out
    tile_budget = max(128, min(8192, (VMEM_BUDGET // bytes_per_col) // 128 * 128))
    total128 = _round_up(total, 128)
    tile_s = min(tile_budget, total128)
    if tile_s == total128 and total128 >= 256:
        # split into >=2 grid steps so both v7x TensorCores get a share
        tile_s = max(128, (total128 // 2) // 128 * 128)
    total_pad = _round_up(total, tile_s)
    if total_pad != total:
        # zero-pad the lane axis: keeps every block full-width (unmasked stores)
        cols = jnp.pad(cols, ((0, 0), (0, total_pad - total)))

    out = pl.pallas_call(
        _final_blaze_kernel,
        out_shape=jax.ShapeDtypeStruct((C, total_pad), x_nchw.dtype),
        grid=(total_pad // tile_s,),
        in_specs=[
            pl.BlockSpec((9 * C, tile_s), lambda s: (0, s)),
            pl.BlockSpec((C, 9 * C), lambda s: (0, 0)),   # constant -> DMA'd once
            pl.BlockSpec((C, 1), lambda s: (0, 0)),       # constant -> DMA'd once
        ],
        out_specs=pl.BlockSpec((C, tile_s), lambda s: (0, s)),
        compiler_params=pltpu.CompilerParams(
            dimension_semantics=("parallel",),
            vmem_limit_bytes=32 * 1024 * 1024),
    )(cols, wfold, bfold)

    # (C, total) -> (N, C, Ho, Wo): tiny output, single (fused) transpose
    out = out[:, :total]
    return jnp.transpose(out.reshape(C, N, Ho, Wo), (1, 0, 2, 3))


def _reference(x_nchw, dw_w, dw_b, pw_w, pw_b):
    """Pure-JAX reference of the PyTorch forward (NCHW)."""
    C = x_nchw.shape[1]
    h = jnp.pad(x_nchw, ((0, 0), (0, 0), (0, 2), (0, 2)))
    h = jax.lax.conv_general_dilated(
        h, dw_w, window_strides=(2, 2), padding="VALID",
        dimension_numbers=("NCHW", "OIHW", "NCHW"), feature_group_count=C,
        precision=jax.lax.Precision.HIGHEST)
    h = h + dw_b[None, :, None, None]
    y = jax.lax.conv_general_dilated(
        h, pw_w, window_strides=(1, 1), padding="VALID",
        dimension_numbers=("NCHW", "OIHW", "NCHW"),
        precision=jax.lax.Precision.HIGHEST)
    y = y + pw_b[None, :, None, None]
    return jnp.maximum(y, 0.0)


if __name__ == "__main__":
    # deterministic synthetic params / input (no checkpoint loading)
    N, C, H, W = 2, 4, 16, 16
    key = jax.random.PRNGKey(0)
    kx, k1, k2, k3, k4 = jax.random.split(key, 5)

    x = jax.random.normal(kx, (N, C, H, W), dtype=jnp.float32)
    dw_w = jax.random.normal(k1, (C, 1, 3, 3), dtype=jnp.float32) * 0.2   # depthwise conv weight
    dw_b = jax.random.normal(k2, (C,), dtype=jnp.float32) * 0.1
    pw_w = jax.random.normal(k3, (C, C, 1, 1), dtype=jnp.float32) * 0.2   # pointwise conv weight
    pw_b = jax.random.normal(k4, (C,), dtype=jnp.float32) * 0.1

    out = final_blaze_block(x, dw_w, dw_b, pw_w, pw_b)
    out = jax.block_until_ready(out)

    ref = _reference(x, dw_w, dw_b, pw_w, pw_b)
    assert out.shape == ref.shape == (N, C, H // 2, W // 2), (out.shape, ref.shape)
    err = float(jnp.max(jnp.abs(out - ref)))
    assert jnp.allclose(out, ref, atol=1e-4, rtol=1e-4), f"max abs err = {err}"

    print("KERNEL_OK")
</pallas_src>

<mosaic_0001>
module attributes {stable_mosaic.version = 11 : i64} {
  func.func @_final_blaze_kernel(%arg0: i32, %arg1: memref<36x128xf32, #tpu.memory_space<vmem>>, %arg2: memref<4x36xf32, #tpu.memory_space<vmem>>, %arg3: memref<4x1xf32, #tpu.memory_space<vmem>>, %arg4: memref<4x128xf32, #tpu.memory_space<vmem>>) attributes {dimension_semantics = [#tpu.dimension_semantics<parallel>], iteration_bounds = array<i64: 1>, scalar_prefetch = 0 : i64, scratch_operands = 0 : i64, tpu.core_type = #tpu.core_type<tc>, window_params = [{transform_indices = @transform_0, window_bounds = array<i64: 36, 128>}, {pipeline_mode = #tpu.pipeline_mode<synchronous>, transform_indices = @transform_1, window_bounds = array<i64: 4, 36>}, {pipeline_mode = #tpu.pipeline_mode<synchronous>, transform_indices = @transform_2, window_bounds = array<i64: 4, 1>}, {transform_indices = @transform_3, window_bounds = array<i64: 4, 128>}]} {
    %c0 = arith.constant 0 : index
    %c0_0 = arith.constant 0 : index
    %0 = vector.load %arg2[%c0, %c0_0] : memref<4x36xf32, #tpu.memory_space<vmem>>, vector<4x36xf32>
    %c0_1 = arith.constant 0 : index
    %c0_2 = arith.constant 0 : index
    %1 = vector.load %arg1[%c0_1, %c0_2] : memref<36x128xf32, #tpu.memory_space<vmem>>, vector<36x128xf32>
    %cst = arith.constant dense<0.000000e+00> : vector<4x128xf32>
    %2 = tpu.matmul %0, %1, %cst {dimension_numbers = #tpu.dot_dimension_numbers<[1], [0], [0], [1], [0, 0, 1, 1], [], []>, precision = #tpu.contract_precision<fp32>} : vector<4x36xf32>, vector<36x128xf32>, vector<4x128xf32> -> vector<4x128xf32>
    %c0_3 = arith.constant 0 : index
    %c0_4 = arith.constant 0 : index
    %3 = vector.load %arg3[%c0_3, %c0_4] : memref<4x1xf32, #tpu.memory_space<vmem>>, vector<4x1xf32>
    %4 = vector.broadcast %3 : vector<4x1xf32> to vector<4x128xf32>
    %5 = arith.addf %2, %4 : vector<4x128xf32>
    %cst_5 = arith.constant 0.000000e+00 : f32
    %6 = vector.broadcast %cst_5 : f32 to vector<4x128xf32>
    %7 = arith.maximumf %5, %6 : vector<4x128xf32>
    %c0_6 = arith.constant 0 : index
    %c0_7 = arith.constant 0 : index
    %8 = vector.load %arg4[%c0_6, %c0_7] : memref<4x128xf32, #tpu.memory_space<vmem>>, vector<4x128xf32>
    tpu.vector_store %arg4[%c0_6, %c0_7], %7 {strides = array<i32>} : memref<4x128xf32, #tpu.memory_space<vmem>>, vector<4x128xf32>,
    return
  }
  func.func @transform_0(%arg0: i32) -> (i32, i32) {
    %c0_i32 = arith.constant 0 : i32
    %c0_i32_0 = arith.constant 0 : i32
    return %c0_i32, %arg0 : i32, i32
  }
  func.func @transform_1(%arg0: i32) -> (i32, i32) {
    %c0_i32 = arith.constant 0 : i32
    %c0_i32_0 = arith.constant 0 : i32
    %c0_i32_1 = arith.constant 0 : i32
    return %c0_i32, %c0_i32_0 : i32, i32
  }
  func.func @transform_2(%arg0: i32) -> (i32, i32) {
    %c0_i32 = arith.constant 0 : i32
    %c0_i32_0 = arith.constant 0 : i32
    %c0_i32_1 = arith.constant 0 : i32
    return %c0_i32, %c0_i32_0 : i32, i32
  }
  func.func @transform_3(%arg0: i32) -> (i32, i32) {
    %c0_i32 = arith.constant 0 : i32
    %c0_i32_0 = arith.constant 0 : i32
    return %c0_i32, %arg0 : i32, i32
  }
}

</mosaic_0001>

<llo_original>
// kernel: final_blaze_block.1
$region0: #{final_blaze_block.1}
  #allocation0 [shape = 'u32[]', space=smem, size = 0x4, offset = 0x4, fixed_abs, tag = 'smem constant byte address 0x4 - core index']
  #allocation1 [shape = 'u32[144,128]{1,0:T(1,128)}', space=vmem, size = 0x12000, scoped, tag = 'internal scratch']
  %s0 = inlined_call_operand.vmem [shape: f32[36,128], index: 0, kind: input, shape index: {}]
  %s1 = inlined_call_operand.vmem [shape: f32[4,36], index: 1, kind: input, shape index: {}]
  %s2 = inlined_call_operand.vmem [shape: f32[4,1], index: 2, kind: input, shape index: {}]
  %s3 = inlined_call_operand.vmem [shape: f32[4,128], index: 3, kind: output, shape index: {}]
  %s4 = sld [smem:[#allocation0]]
  $region22: #{final_blaze_block.1} parent=0
    _
  %s6 = ssub.s32 1, %s4
  %s7 = scalar_select 0, %s6, %s4
  // Predicated region
  $region2: #{final_blaze_block.1} parent=0 // pred_check
    _
  $region3: #{final_blaze_block.1} parent=0 // pred_check_branch
    %9 = sbr.rel (0) target = $region5
  $region4: #{final_blaze_block.1} parent=0 // pred_region
    _
  $region5: #{final_blaze_block.1} parent=0 // pred_fallthru
    _
  // Predicated region
  $region6: #{final_blaze_block.1} parent=0 // pred_check
    _
  $region7: #{final_blaze_block.1} parent=0 // pred_check_branch
    %11 = sbr.rel (0) target = $region9
  $region8: #{final_blaze_block.1} parent=0 // pred_region
    _
  $region9: #{final_blaze_block.1} parent=0 // pred_fallthru
    _
  // Predicated region
  $region10: #{final_blaze_block.1} parent=0 // pred_check
    _
  $region11: #{final_blaze_block.1} parent=0 // pred_check_branch
    %13 = sbr.rel (0) target = $region13
  $region12: #{final_blaze_block.1} parent=0 // pred_region
    _
  $region13: #{final_blaze_block.1} parent=0 // pred_fallthru
    _
  %v14 = vld [vmem:[%s1] sm:$0xf]
  %v15 = vld [vmem:[%s0] sm:$0xff]
  %v16 = vld [vmem:[%s0 + $0x8] sm:$0xff]
  %v17 = vld [vmem:[%s0 + $0x10] sm:$0xff]
  %v18 = vld [vmem:[%s0 + $0x18] sm:$0xff]
  %v19 = vld [vmem:[%s0 + $0x20] sm:$0xf]
  %v20 = vld [vmem:[%s2] sm:$0xf]
  %22 = vset.pattern.permute.xlu0 0
  %23 = vperm.xlu0 %22, %v20
  %v24 = vpop.permute.xlu0 %23
  %vm26 = vcmask 293888
  %v28 = vsel %vm26, %v14, 0
  %vm30 = vcmask 1043456
  %v32 = vsel %vm30, %v19, 0
  %34 = vmatprep.subr.mxu0 0.0
  %35 = vmatpush1.msra.mxu0 0.0
  %36 = vmatprep.subr.mxu0 0.0
  %37 = vmatpush1.msra.mxu0 0.0
  %38 = vmatprep.subr.mxu0 0.0
  %39 = vmatpush1.msra.mxu0 0.0
  %40 = vmatprep.subr.mxu0 0.0
  %41 = vmatpush1.msra.mxu0 0.0
  %42 = vmatprep.subr.mxu0 0.0
  %43 = vmatpush1.msra.mxu0 0.0
  %44 = vmatprep.subr.mxu0 0.0
  %45 = vmatpush1.msra.mxu0 0.0
  %46 = vmatprep.subr.mxu0 0.0
  %47 = vmatpush1.msra.mxu0 0.0
  %48 = vmatprep.subr.mxu0 0.0
  %49 = vmatpush1.msra.mxu0 0.0
  %50 = vmatprep.subr.mxu0 0.0
  %51 = vmatpush1.msra.mxu0 0.0
  %52 = vmatprep.subr.mxu0 0.0
  %53 = vmatpush1.msra.mxu0 0.0
  %54 = vmatprep.subr.mxu0 0.0
  %55 = vmatpush1.msra.mxu0 0.0
  %56 = vmatprep.subr.mxu0 0.0
  %v57 = vand.u32 %v32, 4294901760
  %58 = vmatpush1.msra.mxu0 %v57
  %59 = vmatprep.subr.mxu0 0.0
  %v60 = vand.u32 %v18, 4294901760
  %61 = vmatpush1.msra.mxu0 %v60
  %62 = vmatprep.subr.mxu0 0.0
  %v63 = vand.u32 %v17, 4294901760
  %64 = vmatpush1.msra.mxu0 %v63
  %65 = vmatprep.subr.mxu0 0.0
  %v66 = vand.u32 %v16, 4294901760
  %67 = vmatpush1.msra.mxu0 %v66
  %68 = vmatprep.subr.mxu0 0.0
  %v69 = vand.u32 %v15, 4294901760
  %70 = vmatpush1.msra.mxu0 %v69
  %71 = vmatprep.subr.mxu0 0.0
  %72 = vmatpush2.msra.mxu0 0.0
  %73 = vmatprep.subr.mxu0 0.0
  %74 = vmatpush2.msra.mxu0 0.0
  %75 = vmatprep.subr.mxu0 0.0
  %76 = vmatpush2.msra.mxu0 0.0
  %77 = vmatprep.subr.mxu0 0.0
  %78 = vmatpush2.msra.mxu0 0.0
  %79 = vmatprep.subr.mxu0 0.0
  %80 = vmatpush2.msra.mxu0 0.0
  %81 = vmatprep.subr.mxu0 0.0
  %82 = vmatpush2.msra.mxu0 0.0
  %83 = vmatprep.subr.mxu0 0.0
  %84 = vmatpush2.msra.mxu0 0.0
  %85 = vmatprep.subr.mxu0 0.0
  %86 = vmatpush2.msra.mxu0 0.0
  %87 = vmatprep.subr.mxu0 0.0
  %88 = vmatpush2.msra.mxu0 0.0
  %89 = vmatprep.subr.mxu0 0.0
  %90 = vmatpush2.msra.mxu0 0.0
  %91 = vmatprep.subr.mxu0 0.0
  %92 = vmatpush2.msra.mxu0 0.0
  %93 = vmatprep.subr.mxu0 0.0
  %94 = vmatpush2.msra.mxu0 0.0
  %95 = vmatprep.subr.mxu0 0.0
  %96 = vmatpush2.msra.mxu0 0.0
  %97 = vmatprep.subr.mxu0 0.0
  %98 = vmatpush2.msra.mxu0 0.0
  %99 = vmatprep.subr.mxu0 0.0
  %100 = vmatpush2.msra.mxu0 0.0
  %101 = vmatprep.subr.mxu0 0.0
  %102 = vmatpush2.msra.mxu0 0.0
  %103 = vmatprep.mubr.f32.mxu0 0.0
  %v104 = vand.u32 %v28, 4294901760
  %v105 = vsub.f32 %v28, %v104
  %v106 = vand.u32 %v105, 4294901760
  %v107 = vsub.f32 %v105, %v106
  %v108 = vand.u32 %v107, 4294901760
  %109 = vmatmul.mubr.f32.gmra.mxu0 %v108
  %v110 = vpop.f32.mrf.mxu0
  %v111 = vadd.f32 %v24, %v110
  %v112 = vpop.f32.mrf.mxu0
  %113 = vdwg.mxu0
  %114 = vmatprep.subr.mxu0 0.0
  %115 = vmatpush1.msra.mxu0 0.0
  %116 = vmatprep.subr.mxu0 0.0
  %117 = vmatpush1.msra.mxu0 0.0
  %118 = vmatprep.subr.mxu0 0.0
  %119 = vmatpush1.msra.mxu0 0.0
  %120 = vmatprep.subr.mxu0 0.0
  %121 = vmatpush1.msra.mxu0 0.0
  %122 = vmatprep.subr.mxu0 0.0
  %123 = vmatpush1.msra.mxu0 0.0
  %124 = vmatprep.subr.mxu0 0.0
  %125 = vmatpush1.msra.mxu0 0.0
  %126 = vmatprep.subr.mxu0 0.0
  %127 = vmatpush1.msra.mxu0 0.0
  %128 = vmatprep.subr.mxu0 0.0
  %129 = vmatpush1.msra.mxu0 0.0
  %130 = vmatprep.subr.mxu0 0.0
  %131 = vmatpush1.msra.mxu0 0.0
  %132 = vmatprep.subr.mxu0 0.0
  %133 = vmatpush1.msra.mxu0 0.0
  %134 = vmatprep.subr.mxu0 0.0
  %135 = vmatpush1.msra.mxu0 0.0
  %136 = vmatprep.subr.mxu0 0.0
  %v137 = vand.u32 %v32, 4294901760
  %v138 = vsub.f32 %v32, %v137
  %v139 = vand.u32 %v138, 4294901760
  %v140 = vsub.f32 %v138, %v139
  %v141 = vand.u32 %v140, 4294901760
  %142 = vmatpush1.msra.mxu0 %v141
  %143 = vmatprep.subr.mxu0 0.0
  %v144 = vand.u32 %v18, 4294901760
  %v145 = vsub.f32 %v18, %v144
  %v146 = vand.u32 %v145, 4294901760
  %v147 = vsub.f32 %v145, %v146
  %v148 = vand.u32 %v147, 4294901760
  %149 = vmatpush1.msra.mxu0 %v148
  %150 = vmatprep.subr.mxu0 0.0
  %v151 = vand.u32 %v17, 4294901760
  %v152 = vsub.f32 %v17, %v151
  %v153 = vand.u32 %v152, 4294901760
  %v154 = vsub.f32 %v152, %v153
  %v155 = vand.u32 %v154, 4294901760
  %156 = vmatpush1.msra.mxu0 %v155
  %157 = vmatprep.subr.mxu0 0.0
  %v158 = vand.u32 %v16, 4294901760
  %v159 = vsub.f32 %v16, %v158
  %v160 = vand.u32 %v159, 4294901760
  %v161 = vsub.f32 %v159, %v160
  %v162 = vand.u32 %v161, 4294901760
  %163 = vmatpush1.msra.mxu0 %v162
  %164 = vmatprep.subr.mxu0 0.0
  %v165 = vand.u32 %v15, 4294901760
  %v166 = vsub.f32 %v15, %v165
  %v167 = vand.u32 %v166, 4294901760
  %v168 = vsub.f32 %v166, %v167
  %v169 = vand.u32 %v168, 4294901760
  %170 = vmatpush1.msra.mxu0 %v169
  %171 = vmatprep.subr.mxu0 0.0
  %172 = vmatpush2.msra.mxu0 0.0
  %173 = vmatprep.subr.mxu0 0.0
  %174 = vmatpush2.msra.mxu0 0.0
  %175 = vmatprep.subr.mxu0 0.0
  %176 = vmatpush2.msra.mxu0 0.0
  %177 = vmatprep.subr.mxu0 0.0
  %178 = vmatpush2.msra.mxu0 0.0
  %179 = vmatprep.subr.mxu0 0.0
  %180 = vmatpush2.msra.mxu0 0.0
  %181 = vmatprep.subr.mxu0 0.0
  %182 = vmatpush2.msra.mxu0 0.0
  %183 = vmatprep.subr.mxu0 0.0
  %184 = vmatpush2.msra.mxu0 0.0
  %185 = vmatprep.subr.mxu0 0.0
  %186 = vmatpush2.msra.mxu0 0.0
  %187 = vmatprep.subr.mxu0 0.0
  %188 = vmatpush2.msra.mxu0 0.0
  %189 = vmatprep.subr.mxu0 0.0
  %190 = vmatpush2.msra.mxu0 0.0
  %191 = vmatprep.subr.mxu0 0.0
  %192 = vmatpush2.msra.mxu0 0.0
  %193 = vmatprep.subr.mxu0 0.0
  %194 = vmatpush2.msra.mxu0 0.0
  %195 = vmatprep.subr.mxu0 0.0
  %196 = vmatpush2.msra.mxu0 0.0
  %197 = vmatprep.subr.mxu0 0.0
  %198 = vmatpush2.msra.mxu0 0.0
  %199 = vmatprep.subr.mxu0 0.0
  %200 = vmatpush2.msra.mxu0 0.0
  %201 = vmatprep.subr.mxu0 0.0
  %202 = vmatpush2.msra.mxu0 0.0
  %203 = vmatprep.mubr.f32.mxu0 0.0
  %v204 = vand.u32 %v28, 4294901760
  %205 = vmatmul.mubr.f32.gmra.mxu0 %v204
  %v206 = vpop.f32.mrf.mxu0
  %v207 = vadd.f32 %v111, %v206
  %v208 = vpop.f32.mrf.mxu0
  %209 = vdwg.mxu0
  %210 = vmatprep.subr.mxu0 0.0
  %211 = vmatpush1.msra.mxu0 0.0
  %212 = vmatprep.subr.mxu0 0.0
  %213 = vmatpush1.msra.mxu0 0.0
  %214 = vmatprep.subr.mxu0 0.0
  %215 = vmatpush1.msra.mxu0 0.0
  %216 = vmatprep.subr.mxu0 0.0
  %217 = vmatpush1.msra.mxu0 0.0
  %218 = vmatprep.subr.mxu0 0.0
  %219 = vmatpush1.msra.mxu0 0.0
  %220 = vmatprep.subr.mxu0 0.0
  %221 = vmatpush1.msra.mxu0 0.0
  %222 = vmatprep.subr.mxu0 0.0
  %223 = vmatpush1.msra.mxu0 0.0
  %224 = vmatprep.subr.mxu0 0.0
  %225 = vmatpush1.msra.mxu0 0.0
  %226 = vmatprep.subr.mxu0 0.0
  %227 = vmatpush1.msra.mxu0 0.0
  %228 = vmatprep.subr.mxu0 0.0
  %229 = vmatpush1.msra.mxu0 0.0
  %230 = vmatprep.subr.mxu0 0.0
  %231 = vmatpush1.msra.mxu0 0.0
  %232 = vmatprep.subr.mxu0 0.0
  %v233 = vand.u32 %v32, 4294901760
  %v234 = vsub.f32 %v32, %v233
  %235 = vmatpush1.msra.mxu0 %v234
  %236 = vmatprep.subr.mxu0 0.0
  %v237 = vand.u32 %v18, 4294901760
  %v238 = vsub.f32 %v18, %v237
  %239 = vmatpush1.msra.mxu0 %v238
  %240 = vmatprep.subr.mxu0 0.0
  %v241 = vand.u32 %v17, 4294901760
  %v242 = vsub.f32 %v17, %v241
  %243 = vmatpush1.msra.mxu0 %v242
  %244 = vmatprep.subr.mxu0 0.0
  %v245 = vand.u32 %v16, 4294901760
  %v246 = vsub.f32 %v16, %v245
  %247 = vmatpush1.msra.mxu0 %v246
  %248 = vmatprep.subr.mxu0 0.0
  %v249 = vand.u32 %v15, 4294901760
  %v250 = vsub.f32 %v15, %v249
  %251 = vmatpush1.msra.mxu0 %v250
  %252 = vmatprep.subr.mxu0 0.0
  %253 = vmatpush2.msra.mxu0 0.0
  %254 = vmatprep.subr.mxu0 0.0
  %255 = vmatpush2.msra.mxu0 0.0
  %256 = vmatprep.subr.mxu0 0.0
  %257 = vmatpush2.msra.mxu0 0.0
  %258 = vmatprep.subr.mxu0 0.0
  %259 = vmatpush2.msra.mxu0 0.0
  %260 = vmatprep.subr.mxu0 0.0
  %261 = vmatpush2.msra.mxu0 0.0
  %262 = vmatprep.subr.mxu0 0.0
  %263 = vmatpush2.msra.mxu0 0.0
  %264 = vmatprep.subr.mxu0 0.0
  %265 = vmatpush2.msra.mxu0 0.0
  %266 = vmatprep.subr.mxu0 0.0
  %267 = vmatpush2.msra.mxu0 0.0
  %268 = vmatprep.subr.mxu0 0.0
  %269 = vmatpush2.msra.mxu0 0.0
  %270 = vmatprep.subr.mxu0 0.0
  %271 = vmatpush2.msra.mxu0 0.0
  %272 = vmatprep.subr.mxu0 0.0
  %273 = vmatpush2.msra.mxu0 0.0
  %274 = vmatprep.subr.mxu0 0.0
  %275 = vmatpush2.msra.mxu0 0.0
  %276 = vmatprep.subr.mxu0 0.0
  %277 = vmatpush2.msra.mxu0 0.0
  %278 = vmatprep.subr.mxu0 0.0
  %279 = vmatpush2.msra.mxu0 0.0
  %280 = vmatprep.subr.mxu0 0.0
  %281 = vmatpush2.msra.mxu0 0.0
  %282 = vmatprep.subr.mxu0 0.0
  %283 = vmatpush2.msra.mxu0 0.0
  %284 = vmatprep.mubr.f32.mxu0 0.0
  %v285 = vand.u32 %v28, 4294901760
  %v286 = vsub.f32 %v28, %v285
  %287 = vmatmul.mubr.f32.gmra.mxu0 %v286
  %v288 = vpop.f32.mrf.mxu0
  %v289 = vadd.f32 %v207, %v288
  %v290 = vpop.f32.mrf.mxu0
  %291 = vdwg.mxu0
  %292 = vmatprep.subr.mxu0 0.0
  %293 = vmatpush1.msra.mxu0 0.0
  %294 = vmatprep.subr.mxu0 0.0
  %295 = vmatpush1.msra.mxu0 0.0
  %296 = vmatprep.subr.mxu0 0.0
  %297 = vmatpush1.msra.mxu0 0.0
  %298 = vmatprep.subr.mxu0 0.0
  %299 = vmatpush1.msra.mxu0 0.0
  %300 = vmatprep.subr.mxu0 0.0
  %301 = vmatpush1.msra.mxu0 0.0
  %302 = vmatprep.subr.mxu0 0.0
  %303 = vmatpush1.msra.mxu0 0.0
  %304 = vmatprep.subr.mxu0 0.0
  %305 = vmatpush1.msra.mxu0 0.0
  %306 = vmatprep.subr.mxu0 0.0
  %307 = vmatpush1.msra.mxu0 0.0
  %308 = vmatprep.subr.mxu0 0.0
  %309 = vmatpush1.msra.mxu0 0.0
  %310 = vmatprep.subr.mxu0 0.0
  %311 = vmatpush1.msra.mxu0 0.0
  %312 = vmatprep.subr.mxu0 0.0
  %313 = vmatpush1.msra.mxu0 0.0
  %314 = vmatprep.subr.mxu0 0.0
  %v315 = vand.u32 %v32, 4294901760
  %316 = vmatpush1.msra.mxu0 %v315
  %317 = vmatprep.subr.mxu0 0.0
  %v318 = vand.u32 %v18, 4294901760
  %319 = vmatpush1.msra.mxu0 %v318
  %320 = vmatprep.subr.mxu0 0.0
  %v321 = vand.u32 %v17, 4294901760
  %322 = vmatpush1.msra.mxu0 %v321
  %323 = vmatprep.subr.mxu0 0.0
  %v324 = vand.u32 %v16, 4294901760
  %325 = vmatpush1.msra.mxu0 %v324
  %326 = vmatprep.subr.mxu0 0.0
  %v327 = vand.u32 %v15, 4294901760
  %328 = vmatpush1.msra.mxu0 %v327
  %329 = vmatprep.subr.mxu0 0.0
  %330 = vmatpush2.msra.mxu0 0.0
  %331 = vmatprep.subr.mxu0 0.0
  %332 = vmatpush2.msra.mxu0 0.0
  %333 = vmatprep.subr.mxu0 0.0
  %334 = vmatpush2.msra.mxu0 0.0
  %335 = vmatprep.subr.mxu0 0.0
  %336 = vmatpush2.msra.mxu0 0.0
  %337 = vmatprep.subr.mxu0 0.0
  %338 = vmatpush2.msra.mxu0 0.0
  %339 = vmatprep.subr.mxu0 0.0
  %340 = vmatpush2.msra.mxu0 0.0
  %341 = vmatprep.subr.mxu0 0.0
  %342 = vmatpush2.msra.mxu0 0.0
  %343 = vmatprep.subr.mxu0 0.0
  %344 = vmatpush2.msra.mxu0 0.0
  %345 = vmatprep.subr.mxu0 0.0
  %346 = vmatpush2.msra.mxu0 0.0
  %347 = vmatprep.subr.mxu0 0.0
  %348 = vmatpush2.msra.mxu0 0.0
  %349 = vmatprep.subr.mxu0 0.0
  %350 = vmatpush2.msra.mxu0 0.0
  %351 = vmatprep.subr.mxu0 0.0
  %352 = vmatpush2.msra.mxu0 0.0
  %353 = vmatprep.subr.mxu0 0.0
  %354 = vmatpush2.msra.mxu0 0.0
  %355 = vmatprep.subr.mxu0 0.0
  %356 = vmatpush2.msra.mxu0 0.0
  %357 = vmatprep.subr.mxu0 0.0
  %358 = vmatpush2.msra.mxu0 0.0
  %359 = vmatprep.subr.mxu0 0.0
  %360 = vmatpush2.msra.mxu0 0.0
  %361 = vmatprep.mubr.f32.mxu0 0.0
  %v362 = vand.u32 %v28, 4294901760
  %v363 = vsub.f32 %v28, %v362
  %v364 = vand.u32 %v363, 4294901760
  %365 = vmatmul.mubr.f32.gmra.mxu0 %v364
  %v366 = vpop.f32.mrf.mxu0
  %v367 = vadd.f32 %v289, %v366
  %v368 = vpop.f32.mrf.mxu0
  %369 = vdwg.mxu0
  %370 = vmatprep.subr.mxu0 0.0
  %371 = vmatpush1.msra.mxu0 0.0
  %372 = vmatprep.subr.mxu0 0.0
  %373 = vmatpush1.msra.mxu0 0.0
  %374 = vmatprep.subr.mxu0 0.0
  %375 = vmatpush1.msra.mxu0 0.0
  %376 = vmatprep.subr.mxu0 0.0
  %377 = vmatpush1.msra.mxu0 0.0
  %378 = vmatprep.subr.mxu0 0.0
  %379 = vmatpush1.msra.mxu0 0.0
  %380 = vmatprep.subr.mxu0 0.0
  %381 = vmatpush1.msra.mxu0 0.0
  %382 = vmatprep.subr.mxu0 0.0
  %383 = vmatpush1.msra.mxu0 0.0
  %384 = vmatprep.subr.mxu0 0.0
  %385 = vmatpush1.msra.mxu0 0.0
  %386 = vmatprep.subr.mxu0 0.0
  %387 = vmatpush1.msra.mxu0 0.0
  %388 = vmatprep.subr.mxu0 0.0
  %389 = vmatpush1.msra.mxu0 0.0
  %390 = vmatprep.subr.mxu0 0.0
  %391 = vmatpush1.msra.mxu0 0.0
  %392 = vmatprep.subr.mxu0 0.0
  %v393 = vand.u32 %v32, 4294901760
  %v394 = vsub.f32 %v32, %v393
  %v395 = vand.u32 %v394, 4294901760
  %396 = vmatpush1.msra.mxu0 %v395
  %397 = vmatprep.subr.mxu0 0.0
  %v398 = vand.u32 %v18, 4294901760
  %v399 = vsub.f32 %v18, %v398
  %v400 = vand.u32 %v399, 4294901760
  %401 = vmatpush1.msra.mxu0 %v400
  %402 = vmatprep.subr.mxu0 0.0
  %v403 = vand.u32 %v17, 4294901760
  %v404 = vsub.f32 %v17, %v403
  %v405 = vand.u32 %v404, 4294901760
  %406 = vmatpush1.msra.mxu0 %v405
  %407 = vmatprep.subr.mxu0 0.0
  %v408 = vand.u32 %v16, 4294901760
  %v409 = vsub.f32 %v16, %v408
  %v410 = vand.u32 %v409, 4294901760
  %411 = vmatpush1.msra.mxu0 %v410
  %412 = vmatprep.subr.mxu0 0.0
  %v413 = vand.u32 %v15, 4294901760
  %v414 = vsub.f32 %v15, %v413
  %v415 = vand.u32 %v414, 4294901760
  %416 = vmatpush1.msra.mxu0 %v415
  %417 = vmatprep.subr.mxu0 0.0
  %418 = vmatpush2.msra.mxu0 0.0
  %419 = vmatprep.subr.mxu0 0.0
  %420 = vmatpush2.msra.mxu0 0.0
  %421 = vmatprep.subr.mxu0 0.0
  %422 = vmatpush2.msra.mxu0 0.0
  %423 = vmatprep.subr.mxu0 0.0
  %424 = vmatpush2.msra.mxu0 0.0
  %425 = vmatprep.subr.mxu0 0.0
  %426 = vmatpush2.msra.mxu0 0.0
  %427 = vmatprep.subr.mxu0 0.0
  %428 = vmatpush2.msra.mxu0 0.0
  %429 = vmatprep.subr.mxu0 0.0
  %430 = vmatpush2.msra.mxu0 0.0
  %431 = vmatprep.subr.mxu0 0.0
  %432 = vmatpush2.msra.mxu0 0.0
  %433 = vmatprep.subr.mxu0 0.0
  %434 = vmatpush2.msra.mxu0 0.0
  %435 = vmatprep.subr.mxu0 0.0
  %436 = vmatpush2.msra.mxu0 0.0
  %437 = vmatprep.subr.mxu0 0.0
  %438 = vmatpush2.msra.mxu0 0.0
  %439 = vmatprep.subr.mxu0 0.0
  %440 = vmatpush2.msra.mxu0 0.0
  %441 = vmatprep.subr.mxu0 0.0
  %442 = vmatpush2.msra.mxu0 0.0
  %443 = vmatprep.subr.mxu0 0.0
  %444 = vmatpush2.msra.mxu0 0.0
  %445 = vmatprep.subr.mxu0 0.0
  %446 = vmatpush2.msra.mxu0 0.0
  %447 = vmatprep.subr.mxu0 0.0
  %448 = vmatpush2.msra.mxu0 0.0
  %449 = vmatprep.mubr.f32.mxu0 0.0
  %v450 = vand.u32 %v28, 4294901760
  %451 = vmatmul.mubr.f32.gmra.mxu0 %v450
  %v452 = vpop.f32.mrf.mxu0
  %v453 = vadd.f32 %v367, %v452
  %v454 = vpop.f32.mrf.mxu0
  %455 = vdwg.mxu0
  %456 = vmatprep.subr.mxu0 0.0
  %457 = vmatpush1.msra.mxu0 0.0
  %458 = vmatprep.subr.mxu0 0.0
  %459 = vmatpush1.msra.mxu0 0.0
  %460 = vmatprep.subr.mxu0 0.0
  %461 = vmatpush1.msra.mxu0 0.0
  %462 = vmatprep.subr.mxu0 0.0
  %463 = vmatpush1.msra.mxu0 0.0
  %464 = vmatprep.subr.mxu0 0.0
  %465 = vmatpush1.msra.mxu0 0.0
  %466 = vmatprep.subr.mxu0 0.0
  %467 = vmatpush1.msra.mxu0 0.0
  %468 = vmatprep.subr.mxu0 0.0
  %469 = vmatpush1.msra.mxu0 0.0
  %470 = vmatprep.subr.mxu0 0.0
  %471 = vmatpush1.msra.mxu0 0.0
  %472 = vmatprep.subr.mxu0 0.0
  %473 = vmatpush1.msra.mxu0 0.0
  %474 = vmatprep.subr.mxu0 0.0
  %475 = vmatpush1.msra.mxu0 0.0
  %476 = vmatprep.subr.mxu0 0.0
  %477 = vmatpush1.msra.mxu0 0.0
  %478 = vmatprep.subr.mxu0 0.0
  %v479 = vand.u32 %v32, 4294901760
  %480 = vmatpush1.msra.mxu0 %v479
  %481 = vmatprep.subr.mxu0 0.0
  %v482 = vand.u32 %v18, 4294901760
  %483 = vmatpush1.msra.mxu0 %v482
  %484 = vmatprep.subr.mxu0 0.0
  %v485 = vand.u32 %v17, 4294901760
  %486 = vmatpush1.msra.mxu0 %v485
  %487 = vmatprep.subr.mxu0 0.0
  %v488 = vand.u32 %v16, 4294901760
  %489 = vmatpush1.msra.mxu0 %v488
  %490 = vmatprep.subr.mxu0 0.0
  %v491 = vand.u32 %v15, 4294901760
  %492 = vmatpush1.msra.mxu0 %v491
  %493 = vmatprep.subr.mxu0 0.0
  %494 = vmatpush2.msra.mxu0 0.0
  %495 = vmatprep.subr.mxu0 0.0
  %496 = vmatpush2.msra.mxu0 0.0
  %497 = vmatprep.subr.mxu0 0.0
  %498 = vmatpush2.msra.mxu0 0.0
  %499 = vmatprep.subr.mxu0 0.0
  %500 = vmatpush2.msra.mxu0 0.0
  %501 = vmatprep.subr.mxu0 0.0
  %502 = vmatpush2.msra.mxu0 0.0
  %503 = vmatprep.subr.mxu0 0.0
  %504 = vmatpush2.msra.mxu0 0.0
  %505 = vmatprep.subr.mxu0 0.0
  %506 = vmatpush2.msra.mxu0 0.0
  %507 = vmatprep.subr.mxu0 0.0
  %508 = vmatpush2.msra.mxu0 0.0
  %509 = vmatprep.subr.mxu0 0.0
  %510 = vmatpush2.msra.mxu0 0.0
  %511 = vmatprep.subr.mxu0 0.0
  %512 = vmatpush2.msra.mxu0 0.0
  %513 = vmatprep.subr.mxu0 0.0
  %514 = vmatpush2.msra.mxu0 0.0
  %515 = vmatprep.subr.mxu0 0.0
  %516 = vmatpush2.msra.mxu0 0.0
  %517 = vmatprep.subr.mxu0 0.0
  %518 = vmatpush2.msra.mxu0 0.0
  %519 = vmatprep.subr.mxu0 0.0
  %520 = vmatpush2.msra.mxu0 0.0
  %521 = vmatprep.subr.mxu0 0.0
  %522 = vmatpush2.msra.mxu0 0.0
  %523 = vmatprep.subr.mxu0 0.0
  %524 = vmatpush2.msra.mxu0 0.0
  %525 = vmatprep.mubr.f32.mxu0 0.0
  %v526 = vand.u32 %v28, 4294901760
  %527 = vmatmul.mubr.f32.gmra.mxu0 %v526
  %v528 = vpop.f32.mrf.mxu0
  %v529 = vadd.f32 %v453, %v528
  %v530 = vpop.f32.mrf.mxu0
  %531 = vdwg.mxu0
  %v532 = vmax.f32 %v529, 0.0
  %533 = vst [vmem:[%s3] sm:$0xf] %v532
  // Predicated region
  $region14: #{final_blaze_block.1} parent=0 // pred_check
    _
  $region15: #{final_blaze_block.1} parent=0 // pred_check_branch
    %535 = sbr.rel (0) target = $region17
  $region16: #{final_blaze_block.1} parent=0 // pred_region
    _
  $region17: #{final_blaze_block.1} parent=0 // pred_fallthru
    _
  // Predicated region
  $region18: #{final_blaze_block.1} parent=0 // pred_check
    _
  $region19: #{final_blaze_block.1} parent=0 // pred_check_branch
    %537 = sbr.rel (0) target = $region21
  $region20: #{final_blaze_block.1} parent=0 // pred_region
    _
  $region21: #{final_blaze_block.1} parent=0 // pred_fallthru
    _

</llo_original>
